<compile_context>
chip_gen: v5e
topology: v5e:2x2
jax: 0.10.0
libtpu: 0.0.40
codegen_flags: <defaults>
</compile_context>

<pallas_src>
import functools
import itertools

import numpy as np
import jax
import jax.numpy as jnp
from jax import lax
from jax.experimental import pallas as pl
from jax.experimental.pallas import tpu as pltpu


# ----------------------------------------------------------------------------
# Host-side basis setup (glue)
# ----------------------------------------------------------------------------
def total_degree_exponents(dim, order):
    """All multi-indices alpha with 0 <= |alpha| <= order, deterministic order."""
    exps = []
    for total in range(order + 1):
        for combo in itertools.product(range(total + 1), repeat=dim):
            if sum(combo) == total:
                exps.append(combo)
    return np.asarray(exps, dtype=np.int32)  # (nterms, dim)


def _num_tensorcores():
    """2 for chips whose 'parallel' grid axes shard across two TensorCores."""
    try:
        kind = jax.devices()[0].device_kind.lower()
    except Exception:
        return 1
    return 2 if any(tag in kind for tag in ("v7", "v4", "v5p")) else 1


def _choose_tiling(nb, dim, dual_tc):
    """Pick (s_blk, grid_steps, sc, n_chunks) for y/out folded as (dim, nb, 128)."""
    # Per-block byte budget keeps the double-buffered in+out footprint well under the
    # scoped-VMEM default on v5e/v6e/v7x (<= ~8 MiB total).
    max_s = max(8, ((2 << 20) // (dim * 128 * 4)) // 8 * 8)

    # Candidate block heights: nb itself (block == full array dim is always legal) plus
    # every multiple of 8 that divides nb.  Prefer: fits the budget; on dual-TC parts an
    # even number of grid steps (both cores busy), on single-TC exactly one step (no
    # per-step fixed overhead); then the biggest block.
    cands = [nb] + [s for s in range(8, min(nb, max_s) + 1, 8) if nb % s == 0]

    def score(s):
        steps = nb // s
        return (s <= max_s,
                (steps % 2 == 0) if dual_tc else (steps == 1),
                s)

    s_blk = max(cands, key=score)
    grid_steps = nb // s_blk

    # Inner sublane chunking bounds vreg live ranges (each live slab stays <= 4 vregs).
    if s_blk % 8 == 0:
        sc = next(c for c in (32, 16, 8) if s_blk % c == 0)
    else:
        sc = s_blk  # nb < 8 (or not a multiple of 8): single full-block chunk
    return s_blk, grid_steps, sc, s_blk // sc


# ----------------------------------------------------------------------------
# Pallas kernel: nested-Horner polynomial evaluation on (S, 128) slabs
# ----------------------------------------------------------------------------
def _horner(terms, d, dim, slabs, coef):
    """Evaluate sum_k coef(k) * prod_{i >= d} slabs[i]^alpha_k[i] by nested Horner.

    `terms` is a static list of (alpha, k).  Returns (value, is_scalar); scalar values
    stay on the scalar unit until they must touch a slab (scalar-operand VPU mul/add,
    no lane broadcasts, no wasted `ones` multiplies).
    """
    if d == dim:
        assert len(terms) == 1  # multi-indices are unique
        return coef(terms[0][1]), True

    groups = {}
    for alpha, k in terms:
        groups.setdefault(alpha[d], []).append((alpha, k))

    acc = None     # slab-valued accumulator
    acc_s = None   # scalar-valued accumulator (never live together with `acc`)
    for a in range(max(groups), -1, -1):
        if acc is not None:
            acc = acc * slabs[d]
        elif acc_s is not None:
            acc = acc_s * slabs[d]
            acc_s = None
        if a in groups:
            val, is_scalar = _horner(groups[a], d + 1, dim, slabs, coef)
            if is_scalar:
                if acc is None:
                    acc_s = val if acc_s is None else acc_s + val
                else:
                    acc = acc + val
            else:
                if acc is None:
                    acc = val if acc_s is None else val + acc_s
                    acc_s = None
                else:
                    acc = acc + val
    return (acc_s, True) if acc is None else (acc, False)


def poly_kernel(y_ref, w_ref, out_ref, *, exps, sc, n_chunks):
    """y_ref/out_ref: (dim, S_blk, 128) VMEM tiles; w_ref: (dim, nterms) SMEM scalars."""
    dim = y_ref.shape[0]
    terms = [(alpha, k) for k, alpha in enumerate(exps)]

    def do_chunk(start):
        slabs = [y_ref[d, pl.ds(start, sc), :] for d in range(dim)]     # (sc, 128) each
        for j in range(dim):
            val, is_scalar = _horner(terms, 0, dim, slabs,
                                     lambda k, j=j: w_ref[j, k])
            if is_scalar:  # only possible when order == 0
                val = jnp.full((sc, 128), val, dtype=jnp.float32)
            out_ref[j, pl.ds(start, sc), :] = val.astype(out_ref.dtype)

    if n_chunks == 1:
        do_chunk(0)
    else:
        def body(c, carry):
            do_chunk(pl.multiple_of(c * sc, sc))
            return carry
        lax.fori_loop(0, n_chunks, body, 0, unroll=False)


# ----------------------------------------------------------------------------
# Wrappers
# ----------------------------------------------------------------------------
def odefunc_poly_forward_folded(t, y_folded, w, *, exps):
    """Forward in the recommended folded layout: y_folded is (dim, B//128, 128).

    Keeping the state in this layout across the whole ODE integration avoids the
    transpose/reshape HBM round trips of the (B, dim) compatibility entry point.
    """
    del t  # unused, matches ODEfuncPoly.forward(t, y)
    dim, nb, lanes = y_folded.shape
    assert lanes == 128
    E = np.asarray(exps, dtype=np.int32)
    nterms = E.shape[0]
    assert w.shape == (dim, nterms)

    s_blk, grid_steps, sc, n_chunks = _choose_tiling(nb, dim, _num_tensorcores() == 2)

    kernel = functools.partial(
        poly_kernel, exps=tuple(map(tuple, E.tolist())), sc=sc, n_chunks=n_chunks)

    return pl.pallas_call(
        kernel,
        out_shape=jax.ShapeDtypeStruct((dim, nb, 128), jnp.float32),
        grid_spec=pltpu.PrefetchScalarGridSpec(
            num_scalar_prefetch=0,
            grid=(grid_steps,),
            in_specs=[
                pl.BlockSpec((dim, s_blk, 128), lambda i: (0, i, 0)),   # y slab block
                pl.BlockSpec(memory_space=pltpu.MemorySpace.SMEM),      # W as SMEM scalars
            ],
            out_specs=pl.BlockSpec((dim, s_blk, 128), lambda i: (0, i, 0)),
        ),
        compiler_params=pltpu.CompilerParams(
            dimension_semantics=("parallel",)),
    )(jnp.asarray(y_folded, jnp.float32), jnp.asarray(w, jnp.float32))


def fold_batch(y):
    """(B, dim) -> (dim, ceil(B/128), 128): batch folded onto sublanes + lanes."""
    B, dim = y.shape
    bp = ((B + 127) // 128) * 128
    yt = jnp.asarray(y, jnp.float32).T                   # (dim, B)
    if bp != B:
        yt = jnp.pad(yt, ((0, 0), (0, bp - B)))
    return yt.reshape(dim, bp // 128, 128)


def unfold_batch(out_folded, B):
    dim = out_folded.shape[0]
    return out_folded.reshape(dim, -1)[:, :B].T          # (B, dim)


def odefunc_poly_forward(t, y, w, *, exps):
    """Drop-in ODEfuncPoly.forward: y (B, dim) -> (B, dim).

    For ODE integration prefer odefunc_poly_forward_folded and keep the folded layout
    across RK steps; the fold/unfold here costs extra transpose/reshape kernels.
    """
    B = y.shape[0]
    return unfold_batch(odefunc_poly_forward_folded(t, fold_batch(y), w, exps=exps), B)


# ----------------------------------------------------------------------------
# Main: deterministic params, run, check against a float64 numpy reference
# ----------------------------------------------------------------------------
if __name__ == "__main__":
    dim, order = 2, 3
    E_np = total_degree_exponents(dim, order)            # (nterms, dim) = (10, 2)
    nterms = E_np.shape[0]

    key = jax.random.PRNGKey(0)
    kW, kY = jax.random.split(key)

    # nn.Linear(nterms, dim, bias=False) default init: U(-1/sqrt(nterms), 1/sqrt(nterms))
    bound = 1.0 / np.sqrt(nterms)
    W = jax.random.uniform(kW, (dim, nterms), jnp.float32, -bound, bound)

    t = jnp.float32(0.0)
    W_np = np.asarray(W, np.float64)
    E_f = E_np.astype(np.float64)

    # 1024 exercises the single-block straight-line path; 8192 exercises the
    # chunked / multi-step paths.  Both are tiny (<=64 KB of state).
    for batch in (1024, 8192):
        y = jax.random.normal(jax.random.fold_in(kY, batch), (batch, dim), jnp.float32)
        out = jax.block_until_ready(odefunc_poly_forward(t, y, W, exps=E_np))

        y_np = np.asarray(y, np.float64)
        P_ref = np.prod(y_np[:, None, :] ** E_f[None, :, :], axis=-1)   # (batch, nterms)
        ref = P_ref @ W_np.T                                            # (batch, dim)
        np.testing.assert_allclose(np.asarray(out), ref, rtol=1e-5, atol=1e-4)

    # TODO(synk): self.NFE counter is Python-side training-loop bookkeeping, not kernel math.
    print("KERNEL_OK")
</pallas_src>

<mosaic_0001>
module attributes {stable_mosaic.version = 11 : i64} {
  func.func @poly_kernel(%arg0: i32, %arg1: memref<2x8x128xf32, #tpu.memory_space<vmem>>, %arg2: memref<2x10xf32, #tpu.memory_space<smem>>, %arg3: memref<2x8x128xf32, #tpu.memory_space<vmem>>) attributes {dimension_semantics = [#tpu.dimension_semantics<parallel>], iteration_bounds = array<i64: 1>, scalar_prefetch = 0 : i64, scratch_operands = 0 : i64, tpu.core_type = #tpu.core_type<tc>, window_params = [{transform_indices = @transform_0, window_bounds = array<i64: 2, 8, 128>}, {transform_indices = @transform_1, window_bounds = array<i64: 2, 10>}, {transform_indices = @transform_2, window_bounds = array<i64: 2, 8, 128>}]} {
    %c0 = arith.constant 0 : index
    %c0_0 = arith.constant 0 : index
    %c0_1 = arith.constant 0 : index
    %0 = vector.load %arg1[%c0, %c0_0, %c0_1] : memref<2x8x128xf32, #tpu.memory_space<vmem>>, vector<1x8x128xf32>
    %1 = vector.shape_cast %0 : vector<1x8x128xf32> to vector<8x128xf32>
    %c1 = arith.constant 1 : index
    %c0_2 = arith.constant 0 : index
    %c0_3 = arith.constant 0 : index
    %2 = vector.load %arg1[%c1, %c0_2, %c0_3] : memref<2x8x128xf32, #tpu.memory_space<vmem>>, vector<1x8x128xf32>
    %3 = vector.shape_cast %2 : vector<1x8x128xf32> to vector<8x128xf32>
    %c0_4 = arith.constant 0 : index
    %c9 = arith.constant 9 : index
    %4 = memref.load %arg2[%c0_4, %c9] : memref<2x10xf32, #tpu.memory_space<smem>>
    %5 = vector.broadcast %4 : f32 to vector<8x128xf32>
    %6 = arith.mulf %5, %1 : vector<8x128xf32>
    %c0_5 = arith.constant 0 : index
    %c8 = arith.constant 8 : index
    %7 = memref.load %arg2[%c0_5, %c8] : memref<2x10xf32, #tpu.memory_space<smem>>
    %8 = vector.broadcast %7 : f32 to vector<8x128xf32>
    %9 = arith.mulf %8, %3 : vector<8x128xf32>
    %c0_6 = arith.constant 0 : index
    %c5 = arith.constant 5 : index
    %10 = memref.load %arg2[%c0_6, %c5] : memref<2x10xf32, #tpu.memory_space<smem>>
    %11 = vector.broadcast %10 : f32 to vector<8x128xf32>
    %12 = arith.addf %9, %11 : vector<8x128xf32>
    %13 = arith.addf %6, %12 : vector<8x128xf32>
    %14 = arith.mulf %13, %1 : vector<8x128xf32>
    %c0_7 = arith.constant 0 : index
    %c7 = arith.constant 7 : index
    %15 = memref.load %arg2[%c0_7, %c7] : memref<2x10xf32, #tpu.memory_space<smem>>
    %16 = vector.broadcast %15 : f32 to vector<8x128xf32>
    %17 = arith.mulf %16, %3 : vector<8x128xf32>
    %c0_8 = arith.constant 0 : index
    %c4 = arith.constant 4 : index
    %18 = memref.load %arg2[%c0_8, %c4] : memref<2x10xf32, #tpu.memory_space<smem>>
    %19 = vector.broadcast %18 : f32 to vector<8x128xf32>
    %20 = arith.addf %17, %19 : vector<8x128xf32>
    %21 = arith.mulf %20, %3 : vector<8x128xf32>
    %c0_9 = arith.constant 0 : index
    %c2 = arith.constant 2 : index
    %22 = memref.load %arg2[%c0_9, %c2] : memref<2x10xf32, #tpu.memory_space<smem>>
    %23 = vector.broadcast %22 : f32 to vector<8x128xf32>
    %24 = arith.addf %21, %23 : vector<8x128xf32>
    %25 = arith.addf %14, %24 : vector<8x128xf32>
    %26 = arith.mulf %25, %1 : vector<8x128xf32>
    %c0_10 = arith.constant 0 : index
    %c6 = arith.constant 6 : index
    %27 = memref.load %arg2[%c0_10, %c6] : memref<2x10xf32, #tpu.memory_space<smem>>
    %28 = vector.broadcast %27 : f32 to vector<8x128xf32>
    %29 = arith.mulf %28, %3 : vector<8x128xf32>
    %c0_11 = arith.constant 0 : index
    %c3 = arith.constant 3 : index
    %30 = memref.load %arg2[%c0_11, %c3] : memref<2x10xf32, #tpu.memory_space<smem>>
    %31 = vector.broadcast %30 : f32 to vector<8x128xf32>
    %32 = arith.addf %29, %31 : vector<8x128xf32>
    %33 = arith.mulf %32, %3 : vector<8x128xf32>
    %c0_12 = arith.constant 0 : index
    %c1_13 = arith.constant 1 : index
    %34 = memref.load %arg2[%c0_12, %c1_13] : memref<2x10xf32, #tpu.memory_space<smem>>
    %35 = vector.broadcast %34 : f32 to vector<8x128xf32>
    %36 = arith.addf %33, %35 : vector<8x128xf32>
    %37 = arith.mulf %36, %3 : vector<8x128xf32>
    %c0_14 = arith.constant 0 : index
    %c0_15 = arith.constant 0 : index
    %38 = memref.load %arg2[%c0_14, %c0_15] : memref<2x10xf32, #tpu.memory_space<smem>>
    %39 = vector.broadcast %38 : f32 to vector<8x128xf32>
    %40 = arith.addf %37, %39 : vector<8x128xf32>
    %41 = arith.addf %26, %40 : vector<8x128xf32>
    %c0_16 = arith.constant 0 : index
    %c0_17 = arith.constant 0 : index
    %c0_18 = arith.constant 0 : index
    %42 = vector.load %arg3[%c0_16, %c0_17, %c0_18] : memref<2x8x128xf32, #tpu.memory_space<vmem>>, vector<1x8x128xf32>
    %43 = vector.shape_cast %42 : vector<1x8x128xf32> to vector<8x128xf32>
    %44 = vector.shape_cast %41 : vector<8x128xf32> to vector<1x8x128xf32>
    tpu.vector_store %arg3[%c0_16, %c0_17, %c0_18], %44 {strides = array<i32>} : memref<2x8x128xf32, #tpu.memory_space<vmem>>, vector<1x8x128xf32>,
    %c1_19 = arith.constant 1 : index
    %c9_20 = arith.constant 9 : index
    %45 = memref.load %arg2[%c1_19, %c9_20] : memref<2x10xf32, #tpu.memory_space<smem>>
    %46 = vector.broadcast %45 : f32 to vector<8x128xf32>
    %47 = arith.mulf %46, %1 : vector<8x128xf32>
    %c1_21 = arith.constant 1 : index
    %c8_22 = arith.constant 8 : index
    %48 = memref.load %arg2[%c1_21, %c8_22] : memref<2x10xf32, #tpu.memory_space<smem>>
    %49 = vector.broadcast %48 : f32 to vector<8x128xf32>
    %50 = arith.mulf %49, %3 : vector<8x128xf32>
    %c1_23 = arith.constant 1 : index
    %c5_24 = arith.constant 5 : index
    %51 = memref.load %arg2[%c1_23, %c5_24] : memref<2x10xf32, #tpu.memory_space<smem>>
    %52 = vector.broadcast %51 : f32 to vector<8x128xf32>
    %53 = arith.addf %50, %52 : vector<8x128xf32>
    %54 = arith.addf %47, %53 : vector<8x128xf32>
    %55 = arith.mulf %54, %1 : vector<8x128xf32>
    %c1_25 = arith.constant 1 : index
    %c7_26 = arith.constant 7 : index
    %56 = memref.load %arg2[%c1_25, %c7_26] : memref<2x10xf32, #tpu.memory_space<smem>>
    %57 = vector.broadcast %56 : f32 to vector<8x128xf32>
    %58 = arith.mulf %57, %3 : vector<8x128xf32>
    %c1_27 = arith.constant 1 : index
    %c4_28 = arith.constant 4 : index
    %59 = memref.load %arg2[%c1_27, %c4_28] : memref<2x10xf32, #tpu.memory_space<smem>>
    %60 = vector.broadcast %59 : f32 to vector<8x128xf32>
    %61 = arith.addf %58, %60 : vector<8x128xf32>
    %62 = arith.mulf %61, %3 : vector<8x128xf32>
    %c1_29 = arith.constant 1 : index
    %c2_30 = arith.constant 2 : index
    %63 = memref.load %arg2[%c1_29, %c2_30] : memref<2x10xf32, #tpu.memory_space<smem>>
    %64 = vector.broadcast %63 : f32 to vector<8x128xf32>
    %65 = arith.addf %62, %64 : vector<8x128xf32>
    %66 = arith.addf %55, %65 : vector<8x128xf32>
    %67 = arith.mulf %66, %1 : vector<8x128xf32>
    %c1_31 = arith.constant 1 : index
    %c6_32 = arith.constant 6 : index
    %68 = memref.load %arg2[%c1_31, %c6_32] : memref<2x10xf32, #tpu.memory_space<smem>>
    %69 = vector.broadcast %68 : f32 to vector<8x128xf32>
    %70 = arith.mulf %69, %3 : vector<8x128xf32>
    %c1_33 = arith.constant 1 : index
    %c3_34 = arith.constant 3 : index
    %71 = memref.load %arg2[%c1_33, %c3_34] : memref<2x10xf32, #tpu.memory_space<smem>>
    %72 = vector.broadcast %71 : f32 to vector<8x128xf32>
    %73 = arith.addf %70, %72 : vector<8x128xf32>
    %74 = arith.mulf %73, %3 : vector<8x128xf32>
    %c1_35 = arith.constant 1 : index
    %c1_36 = arith.constant 1 : index
    %75 = memref.load %arg2[%c1_35, %c1_36] : memref<2x10xf32, #tpu.memory_space<smem>>
    %76 = vector.broadcast %75 : f32 to vector<8x128xf32>
    %77 = arith.addf %74, %76 : vector<8x128xf32>
    %78 = arith.mulf %77, %3 : vector<8x128xf32>
    %c1_37 = arith.constant 1 : index
    %c0_38 = arith.constant 0 : index
    %79 = memref.load %arg2[%c1_37, %c0_38] : memref<2x10xf32, #tpu.memory_space<smem>>
    %80 = vector.broadcast %79 : f32 to vector<8x128xf32>
    %81 = arith.addf %78, %80 : vector<8x128xf32>
    %82 = arith.addf %67, %81 : vector<8x128xf32>
    %c1_39 = arith.constant 1 : index
    %c0_40 = arith.constant 0 : index
    %c0_41 = arith.constant 0 : index
    %83 = vector.load %arg3[%c1_39, %c0_40, %c0_41] : memref<2x8x128xf32, #tpu.memory_space<vmem>>, vector<1x8x128xf32>
    %84 = vector.shape_cast %83 : vector<1x8x128xf32> to vector<8x128xf32>
    %85 = vector.shape_cast %82 : vector<8x128xf32> to vector<1x8x128xf32>
    tpu.vector_store %arg3[%c1_39, %c0_40, %c0_41], %85 {strides = array<i32>} : memref<2x8x128xf32, #tpu.memory_space<vmem>>, vector<1x8x128xf32>,
    return
  }
  func.func @transform_0(%arg0: i32) -> (i32, i32, i32) {
    %c0_i32 = arith.constant 0 : i32
    %c0_i32_0 = arith.constant 0 : i32
    %c0_i32_1 = arith.constant 0 : i32
    return %c0_i32, %arg0, %c0_i32_0 : i32, i32, i32
  }
  func.func @transform_1(%arg0: i32) -> (i32, i32) {
    %c0_i32 = arith.constant 0 : i32
    %c0_i32_0 = arith.constant 0 : i32
    %c0_i32_1 = arith.constant 0 : i32
    return %c0_i32, %c0_i32_0 : i32, i32
  }
  func.func @transform_2(%arg0: i32) -> (i32, i32, i32) {
    %c0_i32 = arith.constant 0 : i32
    %c0_i32_0 = arith.constant 0 : i32
    %c0_i32_1 = arith.constant 0 : i32
    return %c0_i32, %arg0, %c0_i32_0 : i32, i32, i32
  }
}

</mosaic_0001>

<llo_original>
// kernel: tpu_custom_call.1
$region0: #{tpu_custom_call.1}
  #allocation0 [shape = 'u32[]', space=smem, size = 0x4, offset = 0x4, fixed_abs, tag = 'smem constant byte address 0x4 - core index']
  #allocation1 [shape = 'u32[72,128]{1,0:T(1,128)}', space=vmem, size = 0x9000, scoped, tag = 'internal scratch']
  %s0 = inlined_call_operand.hbm [shape: f32[2,8,128], index: 0, kind: input, shape index: {}]
  %s1 = inlined_call_operand.hbm [shape: f32[2,10], index: 1, kind: input, shape index: {}]
  %s2 = inlined_call_operand.hbm [shape: f32[2,8,128], index: 2, kind: output, shape index: {}]
  %s3 = sld [smem:[#allocation0]]
  $region26: #{tpu_custom_call.1} parent=0
    _
  %s5 = ssub.s32 1, %s3
  %s6 = scalar_select 0, %s5, %s3
  $region1: #{tpu_custom_call.1} parent=0
    #allocation2 [shape = 'u8[8192]{0}', space=vmem, size = 0x2000, scoped, tag = 'input window, operand 0, single buffered']
    #allocation3 [shape = 's32[1]{0}', space=sflag, size = 0x4, scoped, tag = 'scoped memory for tpu_custom_call.1']
    #allocation4 [shape = 's32[1]{0}', space=sflag, size = 0x4, scoped, tag = 'scoped memory for tpu_custom_call.1']
    #allocation5 [shape = 's32[1]{0}', space=sflag, size = 0x4, scoped, tag = 'scoped memory for tpu_custom_call.1']
    #allocation6 [shape = 'u8[1024]{0}', space=smem, size = 0x400, scoped, tag = 'input window, operand 1, single buffered']
    #allocation7 [shape = 'u8[8192]{0}', space=vmem, size = 0x2000, scoped, tag = 'output window, operand 0, single buffered']
    %7 = vsyncpa [#allocation3], 0
    %8 = vsyncpa [#allocation5], 0
    %9 = vsyncpa [#allocation4], 0
    // Predicated region
    $region2: #{tpu_custom_call.1} parent=1 // pred_check
      _
    $region3: #{tpu_custom_call.1} parent=1 // pred_check_branch
      %11 = sbr.rel (0) target = $region5
    $region4: #{tpu_custom_call.1} parent=1 // pred_region
      %13 = vsyncadd [#allocation3], 0
      %s14 = sshll.u32 %s0, 4
      %s15 = int_to_ptr.hbm [resolvable:$true] %s14
      %s16 = sshll.u32 [#allocation2], 4
      %s17 = int_to_ptr.vmem [resolvable:$true] %s16
      %22 = dma.hbm_to_vmem [thread:$0]  %s15, 256, %s17, [#allocation3], 128, 128, 8
    $region5: #{tpu_custom_call.1} parent=1 // pred_fallthru
      _
    // Predicated region
    $region6: #{tpu_custom_call.1} parent=1 // pred_check
      _
    $region7: #{tpu_custom_call.1} parent=1 // pred_check_branch
      %24 = sbr.rel (0) target = $region9
    $region8: #{tpu_custom_call.1} parent=1 // pred_region
      %26 = vsyncadd [#allocation5], 0
      %s28 = sshll.u32 %s1, 4
      %s29 = int_to_ptr.hbm [resolvable:$true] %s28
      %31 = dma.hbm_to_smem %s29, 32, [#allocation6], [#allocation5]
    $region9: #{tpu_custom_call.1} parent=1 // pred_fallthru
      _
    // Predicated region
    $region10: #{tpu_custom_call.1} parent=1 // pred_check
      _
    $region11: #{tpu_custom_call.1} parent=1 // pred_check_branch
      %33 = sbr.rel (0) target = $region13
    $region12: #{tpu_custom_call.1} parent=1 // pred_region
      %35 = dma.done [#allocation3], 256
    $region13: #{tpu_custom_call.1} parent=1 // pred_fallthru
      _
    // Predicated region
    $region14: #{tpu_custom_call.1} parent=1 // pred_check
      _
    $region15: #{tpu_custom_call.1} parent=1 // pred_check_branch
      %37 = sbr.rel (0) target = $region17
    $region16: #{tpu_custom_call.1} parent=1 // pred_region
      %39 = dma.done [#allocation5], 32
    $region17: #{tpu_custom_call.1} parent=1 // pred_fallthru
      _
    %40 = sfence
    %v41 = vld [vmem:[#allocation2] sm:$0xff]
    %s42 = scalar_lea.vmem [#allocation2], 8
    %v43 = vld [vmem:[%s42] sm:$0xff]
    %s44 = sld [smem:[#allocation6 + $0x9]]
    %v45 = vstv %s44
    %v46 = vmul.f32 %v45, %v41
    %s47 = sld [smem:[#allocation6 + $0x8]]
    %v48 = vstv %s47
    %v49 = vmul.f32 %v48, %v43
    %s50 = sld [smem:[#allocation6 + $0x5]]
    %v51 = vstv %s50
    %v52 = vadd.f32 %v49, %v51
    %v53 = vadd.f32 %v46, %v52
    %v54 = vmul.f32 %v53, %v41
    %s55 = sld [smem:[#allocation6 + $0x7]]
    %v56 = vstv %s55
    %v57 = vmul.f32 %v56, %v43
    %s58 = sld [smem:[#allocation6 + $0x4]]
    %v59 = vstv %s58
    %v60 = vadd.f32 %v57, %v59
    %v61 = vmul.f32 %v60, %v43
    %s62 = sld [smem:[#allocation6 + $0x2]]
    %v63 = vstv %s62
    %v64 = vadd.f32 %v61, %v63
    %v65 = vadd.f32 %v54, %v64
    %v66 = vmul.f32 %v65, %v41
    %s67 = sld [smem:[#allocation6 + $0x6]]
    %v68 = vstv %s67
    %v69 = vmul.f32 %v68, %v43
    %s70 = sld [smem:[#allocation6 + $0x3]]
    %v71 = vstv %s70
    %v72 = vadd.f32 %v69, %v71
    %v73 = vmul.f32 %v72, %v43
    %s74 = sld [smem:[#allocation6 + $0x1]]
    %v75 = vstv %s74
    %v76 = vadd.f32 %v73, %v75
    %v77 = vmul.f32 %v76, %v43
    %s78 = sld [smem:[#allocation6]]
    %v79 = vstv %s78
    %v80 = vadd.f32 %v77, %v79
    %v81 = vadd.f32 %v66, %v80
    %82 = vst [vmem:[#allocation7] sm:$0xff] %v81
    %s83 = sld [smem:[#allocation6 + $0x89]]
    %v84 = vstv %s83
    %v85 = vmul.f32 %v84, %v41
    %s86 = sld [smem:[#allocation6 + $0x88]]
    %v87 = vstv %s86
    %v88 = vmul.f32 %v87, %v43
    %s89 = sld [smem:[#allocation6 + $0x85]]
    %v90 = vstv %s89
    %v91 = vadd.f32 %v88, %v90
    %v92 = vadd.f32 %v85, %v91
    %v93 = vmul.f32 %v92, %v41
    %s94 = sld [smem:[#allocation6 + $0x87]]
    %v95 = vstv %s94
    %v96 = vmul.f32 %v95, %v43
    %s97 = sld [smem:[#allocation6 + $0x84]]
    %v98 = vstv %s97
    %v99 = vadd.f32 %v96, %v98
    %v100 = vmul.f32 %v99, %v43
    %s101 = sld [smem:[#allocation6 + $0x82]]
    %v102 = vstv %s101
    %v103 = vadd.f32 %v100, %v102
    %v104 = vadd.f32 %v93, %v103
    %v105 = vmul.f32 %v104, %v41
    %s106 = sld [smem:[#allocation6 + $0x86]]
    %v107 = vstv %s106
    %v108 = vmul.f32 %v107, %v43
    %s109 = sld [smem:[#allocation6 + $0x83]]
    %v110 = vstv %s109
    %v111 = vadd.f32 %v108, %v110
    %v112 = vmul.f32 %v111, %v43
    %s113 = sld [smem:[#allocation6 + $0x81]]
    %v114 = vstv %s113
    %v115 = vadd.f32 %v112, %v114
    %v116 = vmul.f32 %v115, %v43
    %s117 = sld [smem:[#allocation6 + $0x80]]
    %v118 = vstv %s117
    %v119 = vadd.f32 %v116, %v118
    %v120 = vadd.f32 %v105, %v119
    %s121 = scalar_lea.vmem [#allocation7], 8
    %122 = vst [vmem:[%s121] sm:$0xff] %v120
    // Predicated region
    $region18: #{tpu_custom_call.1} parent=1 // pred_check
      _
    $region19: #{tpu_custom_call.1} parent=1 // pred_check_branch
      %124 = sbr.rel (0) target = $region21
    $region20: #{tpu_custom_call.1} parent=1 // pred_region
      %126 = vsyncadd [#allocation4], 0
      %s127 = sshll.u32 [#allocation7], 4
      %s128 = int_to_ptr.vmem [resolvable:$true] %s127
      %s129 = sshll.u32 %s2, 4
      %s130 = int_to_ptr.hbm [resolvable:$true] %s129
      %135 = dma.vmem_to_hbm [thread:$0]  %s128, 256, %s130, [#allocation4], 128, 128, 8
    $region21: #{tpu_custom_call.1} parent=1 // pred_fallthru
      _
    // Predicated region
    $region22: #{tpu_custom_call.1} parent=1 // pred_check
      _
    $region23: #{tpu_custom_call.1} parent=1 // pred_check_branch
      %137 = sbr.rel (0) target = $region25
    $region24: #{tpu_custom_call.1} parent=1 // pred_region
      %139 = dma.done [#allocation4], 256
    $region25: #{tpu_custom_call.1} parent=1 // pred_fallthru
      _
    %140 = vsyncpa [#allocation3], 1
    %141 = vsyncpa [#allocation4], 1
    %142 = vsyncpa [#allocation5], 1

</llo_original>
